<compile_context>
chip_gen: v5e
topology: v5e:2x2
jax: 0.10.0
libtpu: 0.0.40
codegen_flags: <defaults>
</compile_context>

<pallas_src>
import functools

import jax
import jax.numpy as jnp
from jax import lax
from jax.experimental import pallas as pl
from jax.experimental.pallas import tpu as pltpu


_LANE = 128
_MAX_TK = 64 * 1024          # per-tile lane cap (keeps several pipeline steps)
_SLACK = 2 * 1024 * 1024     # compiler / internal scratch headroom


def _vmem_capacity_bytes():
    """Per-core VMEM capacity; safe default (v7x per-TC) if query fails."""
    try:
        info = pltpu.get_tpu_info()
        cap = getattr(info, "vmem_capacity_bytes", None)
        if cap:
            return int(cap)
    except Exception:
        pass
    return 64 * 1024 * 1024


def _plan(n, l, max_tk=None):
    """Pick (tk, kt_total, splits, kt_per_split, vmem_limit) for F=(n, l)."""
    cap = _vmem_capacity_bytes()
    # ~96 MiB scoped on 128 MiB parts (v5e/v6e), ~48 MiB on v7x (64 MiB/TC).
    scoped = min((cap * 3) // 4, 100 * 1024 * 1024)
    resident = 2 * n * n * 4                       # resident (1, n, n) f32 gram
    f_budget = scoped - resident - _SLACK
    if f_budget < 2 * n * _LANE * 4:
        # TODO(synk): add a gram-row (M) tiling path for very large n = b*c.
        raise ValueError(
            f"StyleLoss Pallas kernel: n=b*c={n} too large for a resident "
            f"(n, n) gram in VMEM (capacity {cap} B); gram-row tiling needed.")

    tk = f_budget // (2 * n * 4)                   # double-buffered f32 stream
    tk = min(tk, _MAX_TK if max_tk is None else max_tk)
    if tk >= l:
        tk = l                                     # single reduction tile
    else:
        tk = max(_LANE, (tk // _LANE) * _LANE)     # lane-aligned tile

    kt_total = -(-l // tk)                         # ceil(l / tk)
    splits = 2 if kt_total >= 2 else 1             # both TCs on v7x
    kt_per_split = -(-kt_total // splits)

    need = 2 * n * tk * 4 + resident + _SLACK
    vmem_limit = int(min(max(need, 16 * 1024 * 1024), scoped))
    return tk, kt_total, splits, kt_per_split, vmem_limit


# ---------------------------------------------------------------------------
# Kernel: per-split partial gram (un-normalized F_split @ F_split^T).
# ---------------------------------------------------------------------------
def _gram_partial_kernel(f_ref, g_ref, *, l, tk, kt_per_split, mask_lanes,
                         matmul_dtype):
    s = pl.program_id(0)
    k = pl.program_id(1)

    @pl.when(k == 0)
    def _():
        g_ref[...] = jnp.zeros_like(g_ref)

    f = f_ref[...]
    if mask_lanes:
        # Zero the ragged / fully-out-of-range lanes of this reduction tile
        # (a select, so unspecified out-of-bounds data -- even NaNs -- is
        # inert in the matmul).
        g_tile = s * kt_per_split + k
        valid = l - g_tile * tk
        lane = lax.broadcasted_iota(jnp.int32, f.shape, dimension=1)
        f = jnp.where(lane < valid, f, jnp.zeros_like(f))
    if matmul_dtype is not None:
        f = f.astype(matmul_dtype)

    # Contract over the lane axis of BOTH operands: F @ F^T, no transpose.
    partial = lax.dot_general(
        f, f,
        dimension_numbers=(((1,), (1,)), ((), ())),
        preferred_element_type=jnp.float32)
    g_ref[...] += partial[None, :, :]


def _gram_partials(x, *, matmul_dtype=None, max_tk=None):
    """Returns ((splits, n, n) partial grams, n*L normalizer)."""
    b, c, h, w = x.shape
    n, l = b * c, h * w
    f = x.reshape(n, l)                            # glue reshape, no data move

    tk, kt_total, splits, kt_per_split, vmem_limit = _plan(n, l, max_tk)
    mask_lanes = (l % tk != 0) or (splits * kt_per_split != kt_total)

    kernel = functools.partial(
        _gram_partial_kernel, l=l, tk=tk, kt_per_split=kt_per_split,
        mask_lanes=mask_lanes, matmul_dtype=matmul_dtype)

    def f_index(s_idx, k_idx):
        g_tile = s_idx * kt_per_split + k_idx
        # Clamp so the DMA never targets a block fully outside F; the kernel
        # masks any lanes that are not real data.
        return (0, jnp.minimum(g_tile, kt_total - 1))

    partials = pl.pallas_call(
        kernel,
        out_shape=jax.ShapeDtypeStruct((splits, n, n), jnp.float32),
        grid_spec=pltpu.PrefetchScalarGridSpec(
            num_scalar_prefetch=0,
            grid=(splits, kt_per_split),
            in_specs=[pl.BlockSpec((n, tk), f_index)],
            out_specs=pl.BlockSpec((1, n, n), lambda s_idx, k_idx: (s_idx, 0, 0)),
        ),
        compiler_params=pltpu.CompilerParams(
            dimension_semantics=("parallel", "arbitrary"),
            vmem_limit_bytes=vmem_limit,
        ),
    )(f)
    return partials, float(n * l)


def gram_matrix(x, *, matmul_dtype=None, max_tk=None):
    """x: (batch, channels, h, w) -> (b*c, b*c) float32 gram matrix."""
    partials, norm = _gram_partials(x, matmul_dtype=matmul_dtype, max_tk=max_tk)
    # Tiny epilogue in plain XLA: combine the per-core partials and scale.
    return jnp.sum(partials, axis=0) * (1.0 / norm)


def gram_and_style_loss(x, target_gram, *, matmul_dtype=None, max_tk=None):
    """Returns (gram(x), MSE(gram(x), target_gram))."""
    gram = gram_matrix(x, matmul_dtype=matmul_dtype, max_tk=max_tk)
    d = gram - target_gram
    return gram, jnp.mean(d * d)          # n^2 elementwise epilogue in XLA


# ---------------------------------------------------------------------------
# Module-equivalent wrapper.
# ---------------------------------------------------------------------------
class StyleLoss:
    def __init__(self, target_feature, *, matmul_dtype=None):
        # "detach" is a no-op here: the target gram is just a constant array.
        self.matmul_dtype = matmul_dtype
        self.target = gram_matrix(target_feature, matmul_dtype=matmul_dtype)
        self.loss_value = None
        self.gram = None

    def __call__(self, x):
        self.gram, self.loss_value = gram_and_style_loss(
            x, self.target, matmul_dtype=self.matmul_dtype)
        return x  # forward returns the input unchanged, like the nn.Module


if __name__ == "__main__":
    key = jax.random.PRNGKey(0)
    k_t, k_x, k_y = jax.random.split(key, 3)

    def ref_gram(t):
        b, c, h, w = t.shape
        f = t.reshape(b * c, h * w)
        g = jnp.matmul(f, f.T, precision=jax.lax.Precision.HIGHEST)
        return g / (b * c * h * w)

    # --- Main module-equivalent check: NCHW conv features (2, 4, 16, 16) ---
    target_feature = jax.random.normal(k_t, (2, 4, 16, 16), dtype=jnp.float32)
    x = jax.random.normal(k_x, (2, 4, 16, 16), dtype=jnp.float32)

    module = StyleLoss(target_feature)
    out = jax.block_until_ready(module(x))
    loss = jax.block_until_ready(module.loss_value)
    gram = jax.block_until_ready(module.gram)

    ref_g = ref_gram(x)
    ref_loss = jnp.mean((ref_g - ref_gram(target_feature)) ** 2)
    assert out.shape == x.shape and jnp.allclose(out, x)
    assert jnp.allclose(gram, ref_g, rtol=1e-5, atol=1e-6)
    assert jnp.allclose(loss, ref_loss, rtol=1e-5, atol=1e-6), (loss, ref_loss)

    # --- Exercise the split-reduction + ragged-lane-mask path (L=300) ------
    y = jax.random.normal(k_y, (1, 8, 15, 20), dtype=jnp.float32)
    g_tiled = jax.block_until_ready(gram_matrix(y, max_tk=128))
    assert jnp.allclose(g_tiled, ref_gram(y), rtol=1e-5, atol=1e-6)

    # --- Optional reduced-precision MXU path (v5e win), looser tolerance ---
    g_bf16 = jax.block_until_ready(gram_matrix(x, matmul_dtype=jnp.bfloat16))
    assert jnp.allclose(g_bf16, ref_g, rtol=5e-2, atol=5e-3)

    print("KERNEL_OK")
</pallas_src>

<mosaic_0001>
module attributes {stable_mosaic.version = 11 : i64} {
  func.func @_gram_partial_kernel(%arg0: i32, %arg1: i32, %arg2: memref<8x256xf32, #tpu.memory_space<vmem>>, %arg3: memref<1x8x8xf32, #tpu.memory_space<vmem>>) attributes {dimension_semantics = [#tpu.dimension_semantics<parallel>, #tpu.dimension_semantics<arbitrary>], iteration_bounds = array<i64: 1, 1>, scalar_prefetch = 0 : i64, scratch_operands = 0 : i64, tpu.core_type = #tpu.core_type<tc>, window_params = [{transform_indices = @transform_0, window_bounds = array<i64: 8, 256>}, {transform_indices = @transform_1, window_bounds = array<i64: 1, 8, 8>}]} {
    %c0_i32 = arith.constant 0 : i32
    %0 = arith.cmpi eq, %arg1, %c0_i32 : i32
    %1 = arith.extui %0 : i1 to i32
    %c0_i32_0 = arith.constant 0 : i32
    %2 = arith.cmpi ne, %1, %c0_i32_0 : i32
    scf.if %2 {
      %cst_8 = arith.constant 0.000000e+00 : f32
      %9 = vector.broadcast %cst_8 : f32 to vector<1x8x8xf32>
      %c0_9 = arith.constant 0 : index
      %c0_10 = arith.constant 0 : index
      %c0_11 = arith.constant 0 : index
      %10 = vector.load %arg3[%c0_9, %c0_10, %c0_11] : memref<1x8x8xf32, #tpu.memory_space<vmem>>, vector<1x8x8xf32>
      tpu.vector_store %arg3[%c0_9, %c0_10, %c0_11], %9 {strides = array<i32>} : memref<1x8x8xf32, #tpu.memory_space<vmem>>, vector<1x8x8xf32>,
    } else {
    }
    %c0 = arith.constant 0 : index
    %c0_1 = arith.constant 0 : index
    %3 = vector.load %arg2[%c0, %c0_1] : memref<8x256xf32, #tpu.memory_space<vmem>>, vector<8x256xf32>
    %cst = arith.constant dense<0.000000e+00> : vector<8x8xf32>
    %4 = tpu.matmul %3, %3, %cst {dimension_numbers = #tpu.dot_dimension_numbers<[1], [1], [0], [0], [0, 0, 1, 0], [], []>} : vector<8x256xf32>, vector<8x256xf32>, vector<8x8xf32> -> vector<8x8xf32>
    %c0_2 = arith.constant 0 : index
    %c0_3 = arith.constant 0 : index
    %c0_4 = arith.constant 0 : index
    %5 = vector.load %arg3[%c0_2, %c0_3, %c0_4] : memref<1x8x8xf32, #tpu.memory_space<vmem>>, vector<1x8x8xf32>
    %6 = vector.shape_cast %4 : vector<8x8xf32> to vector<1x8x8xf32>
    %7 = arith.addf %5, %6 : vector<1x8x8xf32>
    %c0_5 = arith.constant 0 : index
    %c0_6 = arith.constant 0 : index
    %c0_7 = arith.constant 0 : index
    %8 = vector.load %arg3[%c0_5, %c0_6, %c0_7] : memref<1x8x8xf32, #tpu.memory_space<vmem>>, vector<1x8x8xf32>
    tpu.vector_store %arg3[%c0_5, %c0_6, %c0_7], %7 {strides = array<i32>} : memref<1x8x8xf32, #tpu.memory_space<vmem>>, vector<1x8x8xf32>,
    return
  }
  func.func @transform_0(%arg0: i32, %arg1: i32) -> (i32, i32) {
    %c1_i32 = arith.constant 1 : i32
    %0 = arith.muli %arg0, %c1_i32 : i32
    %1 = arith.addi %0, %arg1 : i32
    %c0_i32 = arith.constant 0 : i32
    %2 = arith.minsi %1, %c0_i32 : i32
    %c0_i32_0 = arith.constant 0 : i32
    %c0_i32_1 = arith.constant 0 : i32
    return %c0_i32_0, %2 : i32, i32
  }
  func.func @transform_1(%arg0: i32, %arg1: i32) -> (i32, i32, i32) {
    %c0_i32 = arith.constant 0 : i32
    %c0_i32_0 = arith.constant 0 : i32
    %c0_i32_1 = arith.constant 0 : i32
    return %arg0, %c0_i32, %c0_i32_0 : i32, i32, i32
  }
}

</mosaic_0001>

<llo_original>
// kernel: tpu_custom_call.1
$region0: #{tpu_custom_call.1}
  #allocation0 [shape = 'u32[]', space=smem, size = 0x4, offset = 0x4, fixed_abs, tag = 'smem constant byte address 0x4 - core index']
  #allocation1 [shape = 'u32[72,128]{1,0:T(1,128)}', space=vmem, size = 0x9000, scoped, tag = 'internal scratch']
  %s0 = inlined_call_operand.hbm [shape: f32[8,256], index: 0, kind: input, shape index: {}]
  %s1 = inlined_call_operand.hbm [shape: f32[1,8,8], index: 1, kind: output, shape index: {}]
  %s2 = sld [smem:[#allocation0]]
  $region22: #{tpu_custom_call.1} parent=0
    _
  %s4 = ssub.s32 1, %s2
  %s5 = scalar_select 0, %s4, %s2
  $region1: #{tpu_custom_call.1} parent=0
    #allocation2 [shape = 'u8[8192]{0}', space=vmem, size = 0x2000, scoped, tag = 'input window, operand 0, single buffered']
    #allocation3 [shape = 's32[1]{0}', space=sflag, size = 0x4, scoped, tag = 'scoped memory for tpu_custom_call.1']
    #allocation4 [shape = 's32[1]{0}', space=sflag, size = 0x4, scoped, tag = 'scoped memory for tpu_custom_call.1']
    #allocation5 [shape = 'u8[4096]{0}', space=vmem, size = 0x1000, scoped, tag = 'output window, operand 0, single buffered']
    %6 = vsyncpa [#allocation3], 0
    %7 = vsyncpa [#allocation4], 0
    // Predicated region
    $region2: #{tpu_custom_call.1} parent=1 // pred_check
      _
    $region3: #{tpu_custom_call.1} parent=1 // pred_check_branch
      %9 = sbr.rel (0) target = $region5
    $region4: #{tpu_custom_call.1} parent=1 // pred_region
      %s10 = sadd.s32 0, 0
      %p11 = scmp.lt.s32.totalorder %s10, 0
      %s12 = scalar_select %p11, %s10, 0
      %s13 = smul.u32 2, %s12
      %15 = vsyncadd [#allocation3], 0
      %s16 = smul.addr %s13, 8
      %s17 = scalar_lea.hbm %s0, %s16
      %s19 = sshll.u32 %s17, 4
      %s20 = int_to_ptr.hbm [resolvable:$true] %s19
      %s21 = sshll.u32 [#allocation2], 4
      %s22 = int_to_ptr.vmem [resolvable:$true] %s21
      %24 = dma.hbm_to_vmem [thread:$0]  %s20, 256, %s22, [#allocation3]
    $region5: #{tpu_custom_call.1} parent=1 // pred_fallthru
      _
    // Predicated region
    $region6: #{tpu_custom_call.1} parent=1 // pred_check
      _
    $region7: #{tpu_custom_call.1} parent=1 // pred_check_branch
      %26 = sbr.rel (0) target = $region9
    $region8: #{tpu_custom_call.1} parent=1 // pred_region
      %28 = dma.done [#allocation3], 256
    $region9: #{tpu_custom_call.1} parent=1 // pred_fallthru
      _
    %s29 = sadd.s32 0, 0
    %p30 = scmp.lt.s32.totalorder %s29, 0
    %s31 = scalar_select %p30, %s29, 0
    %s32 = smul.u32 2, %s31
    %p33 = scmp.eq.s32.totalorder 0, 0
    // Predicated region
    $region10: #{tpu_custom_call.1} parent=1 // pred_check
      %p34 = pneg %p33
    $region11: #{tpu_custom_call.1} parent=1 // pred_check_branch
      %36 = sbr.rel (%p34) target = $region13
    $region12: #{tpu_custom_call.1} parent=1 // pred_region
      %vm37 = vcmask 64512
      %38 = vst.msk [vmem:[#allocation5] sm:$0xff] %vm37, 0.0
    $region13: #{tpu_custom_call.1} parent=1 // pred_fallthru
      _
    %v39 = vld [vmem:[#allocation2] sm:$0xff]
    %v40 = vld [vmem:[#allocation2 + $0x8] sm:$0xff]
    %41 = vmatpush.xpose.msra.mxu0 0.0
    %42 = vmatpush.xpose.msra.mxu0 0.0
    %43 = vmatpush.xpose.msra.mxu0 0.0
    %44 = vmatpush.xpose.msra.mxu0 0.0
    %45 = vmatpush.xpose.msra.mxu0 0.0
    %46 = vmatpush.xpose.msra.mxu0 0.0
    %47 = vmatpush.xpose.msra.mxu0 0.0
    %48 = vmatpush.xpose.msra.mxu0 0.0
    %49 = vmatpush.xpose.msra.mxu0 0.0
    %50 = vmatpush.xpose.msra.mxu0 0.0
    %51 = vmatpush.xpose.msra.mxu0 0.0
    %52 = vmatpush.xpose.msra.mxu0 0.0
    %53 = vmatpush.xpose.msra.mxu0 0.0
    %54 = vmatpush.xpose.msra.mxu0 0.0
    %55 = vmatpush.xpose.msra.mxu0 0.0
    %56 = vmatpush.xpose.msra.mxu0 %v39
    %57 = vmatmul.f32.gmra.mxu0 %v39
    %v58 = vpop.f32.mrf.mxu0
    %v59 = vadd.f32 0.0, %v58
    %60 = vdwg.mxu0
    %61 = vmatpush.xpose.msra.mxu0 0.0
    %62 = vmatpush.xpose.msra.mxu0 0.0
    %63 = vmatpush.xpose.msra.mxu0 0.0
    %64 = vmatpush.xpose.msra.mxu0 0.0
    %65 = vmatpush.xpose.msra.mxu0 0.0
    %66 = vmatpush.xpose.msra.mxu0 0.0
    %67 = vmatpush.xpose.msra.mxu0 0.0
    %68 = vmatpush.xpose.msra.mxu0 0.0
    %69 = vmatpush.xpose.msra.mxu0 0.0
    %70 = vmatpush.xpose.msra.mxu0 0.0
    %71 = vmatpush.xpose.msra.mxu0 0.0
    %72 = vmatpush.xpose.msra.mxu0 0.0
    %73 = vmatpush.xpose.msra.mxu0 0.0
    %74 = vmatpush.xpose.msra.mxu0 0.0
    %75 = vmatpush.xpose.msra.mxu0 0.0
    %76 = vmatpush.xpose.msra.mxu0 %v40
    %77 = vmatmul.f32.gmra.mxu0 %v40
    %v78 = vpop.f32.mrf.mxu0
    %v79 = vadd.f32 %v59, %v78
    %80 = vdwg.mxu0
    %v81 = vld [vmem:[#allocation5] sm:$0xff]
    %v82 = vadd.f32 %v81, %v79
    %vm83 = vcmask 64512
    %84 = vst.msk [vmem:[#allocation5] sm:$0xff] %vm83, %v82
    // Predicated region
    $region14: #{tpu_custom_call.1} parent=1 // pred_check
      _
    $region15: #{tpu_custom_call.1} parent=1 // pred_check_branch
      %86 = sbr.rel (0) target = $region17
    $region16: #{tpu_custom_call.1} parent=1 // pred_region
      %88 = vsyncadd [#allocation4], 0
      %s90 = sshll.u32 [#allocation5], 4
      %s91 = int_to_ptr.vmem [resolvable:$true] %s90
      %s92 = sshll.u32 %s1, 4
      %s93 = int_to_ptr.hbm [resolvable:$true] %s92
      %95 = dma.vmem_to_hbm [thread:$0]  %s91, 128, %s93, [#allocation4]
    $region17: #{tpu_custom_call.1} parent=1 // pred_fallthru
      _
    // Predicated region
    $region18: #{tpu_custom_call.1} parent=1 // pred_check
      _
    $region19: #{tpu_custom_call.1} parent=1 // pred_check_branch
      %97 = sbr.rel (0) target = $region21
    $region20: #{tpu_custom_call.1} parent=1 // pred_region
      %99 = dma.done [#allocation4], 128
    $region21: #{tpu_custom_call.1} parent=1 // pred_fallthru
      _
    %100 = vsyncpa [#allocation3], 1
    %101 = vsyncpa [#allocation4], 1

</llo_original>
